<compile_context>
chip_gen: v7x
topology: tpu7x:2x2x1
jax: 0.10.0
libtpu: 0.0.40
codegen_flags: <defaults>
</compile_context>

<pallas_src>
import functools
import math

import jax
import jax.numpy as jnp
from jax.experimental import pallas as pl
from jax.experimental.pallas import tpu as pltpu


@functools.lru_cache(maxsize=None)
def _vmem_limit_bytes():
    """Generation-aware VMEM limit: ~70% of per-core VMEM, capped at 100 MiB."""
    cap = 64 * 1024 * 1024  # conservative default (v7x per-TC VMEM)
    try:
        cap = int(pltpu.get_tpu_info().vmem_capacity_bytes)
    except Exception:
        pass
    return min(int(cap * 0.7), 100 * 1024 * 1024)


def _choose_tile(dim, cap, quantum):
    """Largest tile <= cap that evenly divides `dim`; multiple of `quantum`
    unless the tile is the full dimension (full-extent blocks are always legal)."""
    if dim <= cap:
        return dim
    t = (cap // quantum) * quantum
    while t >= quantum:
        if dim % t == 0:
            return t
        t -= quantum
    return dim  # fall back to a single full-extent block


# --------------------------- fused LN + matmul (+GELU) ---------------------------

def _ln_matmul_kernel(x_ref, g_ref, b_ref, w_ref, bias_ref, o_ref, xn_ref, *, gelu):
    # LayerNorm computed once per row tile (first output-column step) and cached in a
    # bf16 VMEM scratch; subsequent j steps reuse it (saves (N/tn - 1)x of LN work).
    @pl.when(pl.program_id(1) == 0)
    def _():
        x = x_ref[...].astype(jnp.float32)
        mean = jnp.mean(x, axis=-1, keepdims=True)
        var = jnp.mean(jnp.square(x - mean), axis=-1, keepdims=True)
        xn = (x - mean) * jax.lax.rsqrt(var + 1e-5)
        xn = xn * g_ref[...] + b_ref[...]
        xn_ref[...] = xn.astype(jnp.bfloat16)

    # MXU matmul in bf16, f32 accumulation
    y = jnp.dot(xn_ref[...], w_ref[...],
                preferred_element_type=jnp.float32) + bias_ref[...]
    if gelu:
        # GPT-2 "gelu_new" (tanh approximation), kept in f32
        c = math.sqrt(2.0 / math.pi)
        y = 0.5 * y * (1.0 + jnp.tanh(c * (y + 0.044715 * y * y * y)))
    o_ref[...] = y.astype(o_ref.dtype)


def ln_matmul_bias(x, gamma, beta, w, bias, *, gelu=False, out_dtype=jnp.bfloat16):
    """LayerNorm(x) @ w + bias (optionally GELU). x:(M,K) f32, w:(K,N) bf16."""
    M, K = x.shape
    N = w.shape[1]
    tm = _choose_tile(M, 1024, 16)    # large row tile -> fewer weight re-reads from HBM
    tn = _choose_tile(N, 1024, 128)
    grid = (M // tm, N // tn)
    kern = functools.partial(_ln_matmul_kernel, gelu=gelu)
    return pl.pallas_call(
        kern,
        grid=grid,
        in_specs=[
            pl.BlockSpec((tm, K), lambda i, j: (i, 0)),
            pl.BlockSpec((1, K), lambda i, j: (0, 0)),
            pl.BlockSpec((1, K), lambda i, j: (0, 0)),
            pl.BlockSpec((K, tn), lambda i, j: (0, j)),
            pl.BlockSpec((1, tn), lambda i, j: (0, j)),
        ],
        out_specs=pl.BlockSpec((tm, tn), lambda i, j: (i, j)),
        out_shape=jax.ShapeDtypeStruct((M, N), out_dtype),
        scratch_shapes=[pltpu.VMEM((tm, K), jnp.bfloat16)],   # cached LN(x) tile
        compiler_params=pltpu.CompilerParams(
            dimension_semantics=("parallel", "arbitrary"),    # j carries the LN scratch
            vmem_limit_bytes=_vmem_limit_bytes()),
    )(x.astype(jnp.float32), gamma.reshape(1, K).astype(jnp.float32),
      beta.reshape(1, K).astype(jnp.float32), w,
      bias.reshape(1, N).astype(jnp.float32))


# -------------------- K-tiled matmul + bias + residual (fused) --------------------

def _matmul_residual_kernel(x_ref, w_ref, bias_ref, r_ref, o_ref, acc_ref):
    @pl.when(pl.program_id(2) == 0)
    def _():
        acc_ref[...] = jnp.zeros_like(acc_ref)

    acc_ref[...] += jnp.dot(x_ref[...], w_ref[...],
                            preferred_element_type=jnp.float32)

    @pl.when(pl.program_id(2) == pl.num_programs(2) - 1)
    def _():
        o_ref[...] = (acc_ref[...] + bias_ref[...]
                      + r_ref[...].astype(jnp.float32)).astype(o_ref.dtype)


def matmul_bias_residual(x, w, bias, residual, *, out_dtype=jnp.float32):
    """residual + (x @ w + bias). x:(M,K) bf16, w:(K,N) bf16, residual:(M,N) f32.
    The residual buffer is aliased to the output (no fresh (M,N) f32 slab)."""
    M, K = x.shape
    N = w.shape[1]
    tm = _choose_tile(M, 1024, 16)
    tn = _choose_tile(N, 1024, 128)
    tk = _choose_tile(K, 1024, 128)
    grid = (M // tm, N // tn, K // tk)
    return pl.pallas_call(
        _matmul_residual_kernel,
        grid=grid,
        in_specs=[
            pl.BlockSpec((tm, tk), lambda i, j, k: (i, k)),
            pl.BlockSpec((tk, tn), lambda i, j, k: (k, j)),
            pl.BlockSpec((1, tn), lambda i, j, k: (0, j)),
            pl.BlockSpec((tm, tn), lambda i, j, k: (i, j)),
        ],
        out_specs=pl.BlockSpec((tm, tn), lambda i, j, k: (i, j)),
        out_shape=jax.ShapeDtypeStruct((M, N), out_dtype),
        scratch_shapes=[pltpu.VMEM((tm, tn), jnp.float32)],
        input_output_aliases={3: 0},                    # residual -> output (P8)
        compiler_params=pltpu.CompilerParams(
            dimension_semantics=("parallel", "parallel", "arbitrary"),
            vmem_limit_bytes=_vmem_limit_bytes()),
    )(x, w, bias.reshape(1, N).astype(jnp.float32), residual.astype(out_dtype))


# ------------------------- flash attention (per-head, KV-tiled) -------------------------

def _flash_attn_kernel(q_ref, k_ref, v_ref, mask_ref, o_ref,
                       m_sc, l_sc, acc_sc, *, scale):
    kv = pl.program_id(2)
    tkv = k_ref.shape[3]

    @pl.when(kv == 0)
    def _():
        m_sc[...] = jnp.full_like(m_sc, -1e30)
        l_sc[...] = jnp.zeros_like(l_sc)
        acc_sc[...] = jnp.zeros_like(acc_sc)

    q = q_ref[0, 0, 0]                                   # (S, D)   bf16
    k = k_ref[0, 0, 0]                                   # (tkv, D) bf16
    v = v_ref[0, 0, 0]                                   # (tkv, D) bf16

    # scores for this key tile; 1/sqrt(D) folded into the f32 result (no q up/downcast)
    s = jax.lax.dot_general(q, k, (((1,), (1,)), ((), ())),
                            preferred_element_type=jnp.float32) * scale   # (S, tkv)

    S = s.shape[0]
    row = jax.lax.broadcasted_iota(jnp.int32, (S, tkv), 0)
    col = kv * tkv + jax.lax.broadcasted_iota(jnp.int32, (S, tkv), 1)
    key_valid = mask_ref[0] > 0.5                        # (1, tkv)
    valid = jnp.logical_and(col <= row, key_valid)
    s = jnp.where(valid, s, -1e9)

    # online softmax update, all f32 (v5e-safe).
    # TODO(synk): optional bf16 exp on v6e/v7x (bf16 EUP) for ~2x exp throughput.
    m_prev = m_sc[...]
    m_new = jnp.maximum(m_prev, jnp.max(s, axis=-1, keepdims=True))
    alpha = jnp.exp(m_prev - m_new)
    p = jnp.exp(s - m_new)
    l_sc[...] = alpha * l_sc[...] + jnp.sum(p, axis=-1, keepdims=True)
    acc_sc[...] = alpha * acc_sc[...] + jnp.dot(p.astype(jnp.bfloat16), v,
                                                preferred_element_type=jnp.float32)
    m_sc[...] = m_new

    @pl.when(kv == pl.num_programs(2) - 1)
    def _():
        o_ref[0, 0] = (acc_sc[...]
                       * pl.reciprocal(l_sc[...], approx=True)).astype(o_ref.dtype)


def flash_attention(qkv, attention_mask):
    """qkv: (B, 3, NH, S, D) bf16; attention_mask: (B, S) with 1=keep, 0=pad.
    Returns (B, NH, S, D) bf16. Grid is (B, NH, num_kv_tiles) so per-step VMEM is
    one head's (S, tkv) score tile — flat in S and NH."""
    B, _, NH, S, D = qkv.shape
    tkv = _choose_tile(S, 512, 128)
    num_kv = S // tkv
    mask3 = attention_mask.astype(jnp.float32).reshape(B, 1, S)
    kern = functools.partial(_flash_attn_kernel, scale=1.0 / math.sqrt(D))
    return pl.pallas_call(
        kern,
        grid=(B, NH, num_kv),
        in_specs=[
            # q / k / v come from the same (B,3,NH,S,D) array with different index maps
            pl.BlockSpec((1, 1, 1, S, D), lambda b, h, kv: (b, 0, h, 0, 0)),
            pl.BlockSpec((1, 1, 1, tkv, D), lambda b, h, kv: (b, 1, h, kv, 0)),
            pl.BlockSpec((1, 1, 1, tkv, D), lambda b, h, kv: (b, 2, h, kv, 0)),
            pl.BlockSpec((1, 1, tkv), lambda b, h, kv: (b, 0, kv)),
        ],
        out_specs=pl.BlockSpec((1, 1, S, D), lambda b, h, kv: (b, h, 0, 0)),
        out_shape=jax.ShapeDtypeStruct((B, NH, S, D), jnp.bfloat16),
        scratch_shapes=[
            pltpu.VMEM((S, 1), jnp.float32),   # running max
            pltpu.VMEM((S, 1), jnp.float32),   # running denom
            pltpu.VMEM((S, D), jnp.float32),   # running acc
        ],
        compiler_params=pltpu.CompilerParams(
            dimension_semantics=("parallel", "parallel", "arbitrary"),
            vmem_limit_bytes=_vmem_limit_bytes()),
    )(qkv, qkv, qkv, mask3)


# ------------------------- parameter initialization ------------------------

def init_params(key, *, vocab, n_pos, H, n_layer, n_head, num_labels):
    std = 0.02
    k = key

    def nxt():
        nonlocal k
        k, sub = jax.random.split(k)
        return sub

    def normal(shape, dtype=jnp.float32):
        return (std * jax.random.normal(nxt(), shape)).astype(dtype)

    bf = jnp.bfloat16
    layers = []
    for _ in range(n_layer):
        layers.append(dict(
            ln1_g=jnp.ones((H,), jnp.float32), ln1_b=jnp.zeros((H,), jnp.float32),
            attn_w=normal((H, 3 * H), bf), attn_b=jnp.zeros((3 * H,), jnp.float32),
            proj_w=normal((H, H), bf), proj_b=jnp.zeros((H,), jnp.float32),
            ln2_g=jnp.ones((H,), jnp.float32), ln2_b=jnp.zeros((H,), jnp.float32),
            fc_w=normal((H, 4 * H), bf), fc_b=jnp.zeros((4 * H,), jnp.float32),
            mp_w=normal((4 * H, H), bf), mp_b=jnp.zeros((H,), jnp.float32),
        ))
    return dict(
        wte=normal((vocab, H)),
        wpe=normal((n_pos, H)),
        layers=layers,
        lnf_g=jnp.ones((H,), jnp.float32), lnf_b=jnp.zeros((H,), jnp.float32),
        cls_w=normal((H, num_labels), bf), cls_b=jnp.zeros((num_labels,), jnp.float32),
        n_head=n_head,
    )


# ------------------------------- forward pass -------------------------------

def gpt2_classifier_forward(params, input_ids, attention_mask=None, labels=None):
    B, S = input_ids.shape
    H = params["wte"].shape[1]
    NH = params["n_head"]
    D = H // NH
    if attention_mask is None:
        attention_mask = jnp.ones((B, S), jnp.float32)

    # embeddings (gather kept in plain JAX glue); residual stream is f32
    pos = jnp.arange(S)
    h2d = (params["wte"][input_ids] + params["wpe"][pos][None, :, :]).reshape(B * S, H)

    for layer in params["layers"]:
        # --- attention block: LN fused into QKV matmul ---
        qkv2d = ln_matmul_bias(h2d, layer["ln1_g"], layer["ln1_b"],
                               layer["attn_w"], layer["attn_b"],
                               out_dtype=jnp.bfloat16)                    # (B*S, 3H)
        # single head-split relayout per layer; BlockSpec minor-dim rules (D < 128)
        # prevent absorbing this into the attention index_map.
        # TODO(synk): fuse head split/merge into the adjacent matmul kernels.
        qkv = qkv2d.reshape(B, S, 3, NH, D).transpose(0, 2, 3, 1, 4)      # (B,3,NH,S,D)
        attn = flash_attention(qkv, attention_mask)                       # (B,NH,S,D)
        attn2d = attn.transpose(0, 2, 1, 3).reshape(B * S, H)             # head merge
        # proj matmul with residual add fused into the kernel finalize
        h2d = matmul_bias_residual(attn2d, layer["proj_w"], layer["proj_b"], h2d)

        # --- MLP block: LN fused into FC matmul (+GELU), residual fused into mp ---
        f = ln_matmul_bias(h2d, layer["ln2_g"], layer["ln2_b"],
                           layer["fc_w"], layer["fc_b"],
                           gelu=True, out_dtype=jnp.bfloat16)             # (B*S, 4H)
        h2d = matmul_bias_residual(f, layer["mp_w"], layer["mp_b"], h2d)

    # pooled_output = last_hidden_state[:, -1, :]  (as in the PyTorch spec).
    # Note: HF pools the last *non-pad* token; the spec pools position -1, so we follow
    # the spec (assumes left padding). Slice BEFORE the final LN so the final LN +
    # classifier only touch (B, H).
    pooled = h2d.reshape(B, S, H)[:, -1, :]                               # (B, H) f32
    logits = ln_matmul_bias(pooled, params["lnf_g"], params["lnf_b"],
                            params["cls_w"], params["cls_b"],
                            out_dtype=jnp.float32)                        # (B, labels)

    loss = None
    if labels is not None:
        # CrossEntropyLoss (mean over batch) — tiny, kept in plain JAX glue.
        logp = jax.nn.log_softmax(logits, axis=-1)
        loss = -jnp.mean(jnp.take_along_axis(logp, labels[:, None], axis=1))
    return logits, loss


# ----------------------------------- main -----------------------------------

if __name__ == "__main__":
    vocab, n_pos, H, n_layer, n_head, num_labels = 64, 16, 32, 2, 4, 4
    B, S = 2, 8

    root = jax.random.PRNGKey(0)
    kparam, kids = jax.random.split(root)
    params = init_params(kparam, vocab=vocab, n_pos=n_pos, H=H,
                         n_layer=n_layer, n_head=n_head, num_labels=num_labels)

    input_ids = jax.random.randint(kids, (B, S), 0, vocab, dtype=jnp.int32)
    # left-padded example for batch element 1
    attention_mask = jnp.ones((B, S), jnp.float32).at[1, :2].set(0.0)
    labels = jnp.array([1, 3], dtype=jnp.int32)

    logits, loss = gpt2_classifier_forward(params, input_ids,
                                           attention_mask=attention_mask,
                                           labels=labels)
    jax.block_until_ready(logits)
    jax.block_until_ready(loss)
    assert logits.shape == (B, num_labels)
    assert bool(jnp.isfinite(loss))
    assert bool(jnp.all(jnp.isfinite(logits)))
    print("KERNEL_OK")
</pallas_src>

<mosaic_0001>
module attributes {stable_mosaic.version = 11 : i64} {
  func.func @_ln_matmul_kernel(%arg0: i32, %arg1: i32, %arg2: memref<16x32xf32, #tpu.memory_space<vmem>>, %arg3: memref<1x32xf32, #tpu.memory_space<vmem>>, %arg4: memref<1x32xf32, #tpu.memory_space<vmem>>, %arg5: memref<32x96xbf16, #tpu.memory_space<vmem>>, %arg6: memref<1x96xf32, #tpu.memory_space<vmem>>, %arg7: memref<16x96xbf16, #tpu.memory_space<vmem>>, %arg8: memref<16x32xbf16, #tpu.memory_space<vmem>>) attributes {dimension_semantics = [#tpu.dimension_semantics<parallel>, #tpu.dimension_semantics<arbitrary>], iteration_bounds = array<i64: 1, 1>, scalar_prefetch = 0 : i64, scratch_operands = 1 : i64, tpu.core_type = #tpu.core_type<tc>, window_params = [{transform_indices = @transform_0, window_bounds = array<i64: 16, 32>}, {pipeline_mode = #tpu.pipeline_mode<synchronous>, transform_indices = @transform_1, window_bounds = array<i64: 1, 32>}, {pipeline_mode = #tpu.pipeline_mode<synchronous>, transform_indices = @transform_2, window_bounds = array<i64: 1, 32>}, {transform_indices = @transform_3, window_bounds = array<i64: 32, 96>}, {transform_indices = @transform_4, window_bounds = array<i64: 1, 96>}, {transform_indices = @transform_5, window_bounds = array<i64: 16, 96>}]} {
    %c0_i32 = arith.constant 0 : i32
    %0 = arith.cmpi eq, %arg1, %c0_i32 : i32
    %1 = arith.extui %0 : i1 to i32
    %c0_i32_0 = arith.constant 0 : i32
    %2 = arith.cmpi ne, %1, %c0_i32_0 : i32
    scf.if %2 {
      %c0_8 = arith.constant 0 : index
      %c0_9 = arith.constant 0 : index
      %11 = vector.load %arg2[%c0_8, %c0_9] : memref<16x32xf32, #tpu.memory_space<vmem>>, vector<16x32xf32>
      %cst_10 = arith.constant dense<0.000000e+00> : vector<16xf32>
      %12 = vector.multi_reduction <add>, %11, %cst_10 [1] : vector<16x32xf32> to vector<16xf32>
      %13 = vector.shape_cast %12 : vector<16xf32> to vector<16x1xf32>
      %cst_11 = arith.constant 3.200000e+01 : f32
      %14 = vector.broadcast %cst_11 : f32 to vector<16x1xf32>
      %15 = arith.divf %13, %14 : vector<16x1xf32>
      %16 = vector.broadcast %15 : vector<16x1xf32> to vector<16x32xf32>
      %17 = arith.subf %11, %16 : vector<16x32xf32>
      %18 = arith.mulf %17, %17 : vector<16x32xf32>
      %cst_12 = arith.constant dense<0.000000e+00> : vector<16xf32>
      %19 = vector.multi_reduction <add>, %18, %cst_12 [1] : vector<16x32xf32> to vector<16xf32>
      %20 = vector.shape_cast %19 : vector<16xf32> to vector<16x1xf32>
      %cst_13 = arith.constant 3.200000e+01 : f32
      %21 = vector.broadcast %cst_13 : f32 to vector<16x1xf32>
      %22 = arith.divf %20, %21 : vector<16x1xf32>
      %23 = vector.broadcast %15 : vector<16x1xf32> to vector<16x32xf32>
      %24 = arith.subf %11, %23 : vector<16x32xf32>
      %cst_14 = arith.constant 9.99999974E-6 : f32
      %25 = vector.broadcast %cst_14 : f32 to vector<16x1xf32>
      %26 = arith.addf %22, %25 : vector<16x1xf32>
      %27 = math.rsqrt %26 : vector<16x1xf32>
      %28 = vector.broadcast %27 : vector<16x1xf32> to vector<16x32xf32>
      %29 = arith.mulf %24, %28 : vector<16x32xf32>
      %c0_15 = arith.constant 0 : index
      %c0_16 = arith.constant 0 : index
      %30 = vector.load %arg3[%c0_15, %c0_16] : memref<1x32xf32, #tpu.memory_space<vmem>>, vector<1x32xf32>
      %31 = vector.broadcast %30 : vector<1x32xf32> to vector<16x32xf32>
      %32 = arith.mulf %29, %31 : vector<16x32xf32>
      %c0_17 = arith.constant 0 : index
      %c0_18 = arith.constant 0 : index
      %33 = vector.load %arg4[%c0_17, %c0_18] : memref<1x32xf32, #tpu.memory_space<vmem>>, vector<1x32xf32>
      %34 = vector.broadcast %33 : vector<1x32xf32> to vector<16x32xf32>
      %35 = arith.addf %32, %34 : vector<16x32xf32>
      %36 = arith.truncf %35 : vector<16x32xf32> to vector<16x32xbf16>
      %c0_19 = arith.constant 0 : index
      %c0_20 = arith.constant 0 : index
      %37 = vector.load %arg8[%c0_19, %c0_20] : memref<16x32xbf16, #tpu.memory_space<vmem>>, vector<16x32xbf16>
      tpu.vector_store %arg8[%c0_19, %c0_20], %36 {strides = array<i32>} : memref<16x32xbf16, #tpu.memory_space<vmem>>, vector<16x32xbf16>,
    } else {
    }
    %c0 = arith.constant 0 : index
    %c0_1 = arith.constant 0 : index
    %3 = vector.load %arg8[%c0, %c0_1] : memref<16x32xbf16, #tpu.memory_space<vmem>>, vector<16x32xbf16>
    %c0_2 = arith.constant 0 : index
    %c0_3 = arith.constant 0 : index
    %4 = vector.load %arg5[%c0_2, %c0_3] : memref<32x96xbf16, #tpu.memory_space<vmem>>, vector<32x96xbf16>
    %cst = arith.constant dense<0.000000e+00> : vector<16x96xf32>
    %5 = tpu.matmul %3, %4, %cst {dimension_numbers = #tpu.dot_dimension_numbers<[1], [0], [0], [1], [0, 0, 1, 1], [], []>} : vector<16x32xbf16>, vector<32x96xbf16>, vector<16x96xf32> -> vector<16x96xf32>
    %c0_4 = arith.constant 0 : index
    %c0_5 = arith.constant 0 : index
    %6 = vector.load %arg6[%c0_4, %c0_5] : memref<1x96xf32, #tpu.memory_space<vmem>>, vector<1x96xf32>
    %7 = vector.broadcast %6 : vector<1x96xf32> to vector<16x96xf32>
    %8 = arith.addf %5, %7 : vector<16x96xf32>
    %9 = arith.truncf %8 : vector<16x96xf32> to vector<16x96xbf16>
    %c0_6 = arith.constant 0 : index
    %c0_7 = arith.constant 0 : index
    %10 = vector.load %arg7[%c0_6, %c0_7] : memref<16x96xbf16, #tpu.memory_space<vmem>>, vector<16x96xbf16>
    tpu.vector_store %arg7[%c0_6, %c0_7], %9 {strides = array<i32>} : memref<16x96xbf16, #tpu.memory_space<vmem>>, vector<16x96xbf16>,
    return
  }
  func.func @transform_0(%arg0: i32, %arg1: i32) -> (i32, i32) {
    %c0_i32 = arith.constant 0 : i32
    %c0_i32_0 = arith.constant 0 : i32
    return %arg0, %c0_i32 : i32, i32
  }
  func.func @transform_1(%arg0: i32, %arg1: i32) -> (i32, i32) {
    %c0_i32 = arith.constant 0 : i32
    %c0_i32_0 = arith.constant 0 : i32
    %c0_i32_1 = arith.constant 0 : i32
    return %c0_i32, %c0_i32_0 : i32, i32
  }
  func.func @transform_2(%arg0: i32, %arg1: i32) -> (i32, i32) {
    %c0_i32 = arith.constant 0 : i32
    %c0_i32_0 = arith.constant 0 : i32
    %c0_i32_1 = arith.constant 0 : i32
    return %c0_i32, %c0_i32_0 : i32, i32
  }
  func.func @transform_3(%arg0: i32, %arg1: i32) -> (i32, i32) {
    %c0_i32 = arith.constant 0 : i32
    %c0_i32_0 = arith.constant 0 : i32
    return %c0_i32, %arg1 : i32, i32
  }
  func.func @transform_4(%arg0: i32, %arg1: i32) -> (i32, i32) {
    %c0_i32 = arith.constant 0 : i32
    %c0_i32_0 = arith.constant 0 : i32
    return %c0_i32, %arg1 : i32, i32
  }
  func.func @transform_5(%arg0: i32, %arg1: i32) -> (i32, i32) {
    %c0_i32 = arith.constant 0 : i32
    return %arg0, %arg1 : i32, i32
  }
}

</mosaic_0001>

<llo_original>
// kernel: tpu_custom_call.1
$region0: #{tpu_custom_call.1}
  #allocation0 [shape = 'u32[]', space=smem, size = 0x4, offset = 0x4, fixed_abs, tag = 'smem constant byte address 0x4 - core index']
  #allocation1 [shape = 'u32[144,128]{1,0:T(1,128)}', space=vmem, size = 0x12000, scoped, tag = 'internal scratch']
  #allocation2 [shape = 'bf16[16,32]{1,0:T(16,128)(2,1)}', space=vmem, size = 0x1000, scoped, tag = 'scratch operand']
  %s0 = inlined_call_operand.hbm [shape: f32[16,32], index: 0, kind: input, shape index: {}]
  %s1 = inlined_call_operand.vmem [shape: f32[1,32], index: 1, kind: input, shape index: {}]
  %s2 = inlined_call_operand.vmem [shape: f32[1,32], index: 2, kind: input, shape index: {}]
  %s3 = inlined_call_operand.hbm [shape: bf16[32,96], index: 3, kind: input, shape index: {}]
  %s4 = inlined_call_operand.vmem [shape: f32[1,96], index: 4, kind: input, shape index: {}]
  %s5 = inlined_call_operand.hbm [shape: bf16[16,96], index: 5, kind: output, shape index: {}]
  %s6 = sld [smem:[#allocation0]]
  $region42: #{tpu_custom_call.1} parent=0
    _
  %s8 = ssub.s32 1, %s6
  %s9 = scalar_select 0, %s8, %s6
  $region1: #{tpu_custom_call.1} parent=0
    #allocation3 [shape = 'u8[8192]{0}', space=vmem, size = 0x2000, scoped, tag = 'input window, operand 0, single buffered']
    #allocation4 [shape = 's32[1]{0}', space=sflag, size = 0x4, scoped, tag = 'scoped memory for tpu_custom_call.1']
    #allocation5 [shape = 's32[1]{0}', space=sflag, size = 0x4, scoped, tag = 'scoped memory for tpu_custom_call.1']
    #allocation6 [shape = 'u8[8192]{0}', space=vmem, size = 0x2000, scoped, tag = 'input window, operand 3, single buffered']
    #allocation7 [shape = 's32[1]{0}', space=sflag, size = 0x4, scoped, tag = 'scoped memory for tpu_custom_call.1']
    #allocation8 [shape = 'u8[4096]{0}', space=vmem, size = 0x1000, scoped, tag = 'output window, operand 0, single buffered']
    %10 = vsyncpa [#allocation4], 0
    %11 = vsyncpa [#allocation7], 0
    %12 = vsyncpa [#allocation5], 0
    // Predicated region
    $region2: #{tpu_custom_call.1} parent=1 // pred_check
      _
    $region3: #{tpu_custom_call.1} parent=1 // pred_check_branch
      %14 = sbr.rel (0) target = $region5
    $region4: #{tpu_custom_call.1} parent=1 // pred_region
      %s16 = ssub.s32 256, 256
      %17 = vsyncadd [#allocation4], %s16
      %s18 = sshll.u32 [#allocation3], 4
      %s19 = int_to_ptr.vmem [resolvable:$true] %s18
      %24 = dma.hbm_to_vmem [thread:$0]  %s0, 256, %s19, [#allocation4], 128, 128, 8
    $region5: #{tpu_custom_call.1} parent=1 // pred_fallthru
      _
    // Predicated region
    $region6: #{tpu_custom_call.1} parent=1 // pred_check
      _
    $region7: #{tpu_custom_call.1} parent=1 // pred_check_branch
      %26 = sbr.rel (0) target = $region9
    $region8: #{tpu_custom_call.1} parent=1 // pred_region
      _
    $region9: #{tpu_custom_call.1} parent=1 // pred_fallthru
      _
    // Predicated region
    $region10: #{tpu_custom_call.1} parent=1 // pred_check
      _
    $region11: #{tpu_custom_call.1} parent=1 // pred_check_branch
      %28 = sbr.rel (0) target = $region13
    $region12: #{tpu_custom_call.1} parent=1 // pred_region
      _
    $region13: #{tpu_custom_call.1} parent=1 // pred_fallthru
      _
    // Predicated region
    $region14: #{tpu_custom_call.1} parent=1 // pred_check
      _
    $region15: #{tpu_custom_call.1} parent=1 // pred_check_branch
      %30 = sbr.rel (0) target = $region17
    $region16: #{tpu_custom_call.1} parent=1 // pred_region
      %s32 = ssub.s32 256, 256
      %33 = vsyncadd [#allocation7], %s32
      %s34 = sshll.u32 [#allocation6], 4
      %s35 = int_to_ptr.vmem [resolvable:$true] %s34
      %40 = dma.hbm_to_vmem [thread:$0]  %s3, 256, %s35, [#allocation7], 64, 64, 4
    $region17: #{tpu_custom_call.1} parent=1 // pred_fallthru
      _
    // Predicated region
    $region18: #{tpu_custom_call.1} parent=1 // pred_check
      _
    $region19: #{tpu_custom_call.1} parent=1 // pred_check_branch
      %42 = sbr.rel (0) target = $region21
    $region20: #{tpu_custom_call.1} parent=1 // pred_region
      _
    $region21: #{tpu_custom_call.1} parent=1 // pred_fallthru
      _
    // Predicated region
    $region22: #{tpu_custom_call.1} parent=1 // pred_check
      _
    $region23: #{tpu_custom_call.1} parent=1 // pred_check_branch
      %44 = sbr.rel (0) target = $region25
    $region24: #{tpu_custom_call.1} parent=1 // pred_region
      %45 = dma.done [#allocation4], 256
    $region25: #{tpu_custom_call.1} parent=1 // pred_fallthru
      _
    // Predicated region
    $region26: #{tpu_custom_call.1} parent=1 // pred_check
      _
    $region27: #{tpu_custom_call.1} parent=1 // pred_check_branch
      %47 = sbr.rel (0) target = $region29
    $region28: #{tpu_custom_call.1} parent=1 // pred_region
      %48 = dma.done [#allocation7], 256
    $region29: #{tpu_custom_call.1} parent=1 // pred_fallthru
      _
    %p50 = scmp.eq.s32.totalorder 0, 0
    // Predicated region
    $region30: #{tpu_custom_call.1} parent=1 // pred_check
      %p51 = pneg %p50
    $region31: #{tpu_custom_call.1} parent=1 // pred_check_branch
      %53 = sbr.rel (%p51) target = $region33
    $region32: #{tpu_custom_call.1} parent=1 // pred_region
      %v54 = vld [vmem:[#allocation3] sm:$0xff]
      %v55 = vld [vmem:[#allocation3 + $0x8] sm:$0xff]
      %vm56 = vcmask 261120
      %v57 = vsel %vm56, %v54, 0.0
      %58 = vadd.xlane.f32.xlu0 %v57
      %v59 = vpop.xlane.xlu0 %58
      %v60 = vsel %vm56, %v55, 0.0
      %61 = vadd.xlane.f32.xlu0 %v60
      %v62 = vpop.xlane.xlu0 %61
      %v63 = vrcp.pop 32.0
      %v64 = vmul.f32 %v59, %v63
      %v65 = vmul.f32 %v62, %v63
      %v66 = vsub.f32 %v54, %v64
      %v67 = vsub.f32 %v55, %v65
      %v68 = vmul.f32 %v66, %v66
      %v69 = vmul.f32 %v67, %v67
      %v70 = vsel %vm56, %v68, 0.0
      %71 = vadd.xlane.f32.xlu0 %v70
      %v72 = vpop.xlane.xlu0 %71
      %v73 = vsel %vm56, %v69, 0.0
      %74 = vadd.xlane.f32.xlu0 %v73
      %v75 = vpop.xlane.xlu0 %74
      %v76 = vmul.f32 %v72, %v63
      %v77 = vmul.f32 %v75, %v63
      %v78 = vadd.f32 %v76, 1e-05
      %v79 = vadd.f32 %v77, 1e-05
      %v80 = vrsqrt.pop %v78
      %v81 = vrsqrt.pop %v79
      %v82 = vmul.f32 %v66, %v80
      %v83 = vmul.f32 %v67, %v81
      %v84 = vld [vmem:[%s1] sm:$0x1]
      %v86 = vlaneseq
      %v87 = vshrl.u32 %v86, 7
      %v88 = vsub.s32 0, %v87
      %v89 = vrot.slane %v84, %v88
      %v91 = vmul.f32 %v82, %v89
      %v92 = vmul.f32 %v83, %v89
      %v93 = vld [vmem:[%s2] sm:$0x1]
      %v95 = vlaneseq
      %v96 = vshrl.u32 %v95, 7
      %v97 = vsub.s32 0, %v96
      %v98 = vrot.slane %v93, %v97
      %v100 = vadd.f32 %v91, %v98
      %v101 = vadd.f32 %v92, %v98
      %v102 = vpack.c.bf16 %v101, %v100
      %103 = vst.msk [vmem:[#allocation2] sm:$0xff] %vm56, %v102
    $region33: #{tpu_custom_call.1} parent=1 // pred_fallthru
      _
    %v104 = vld [vmem:[#allocation2] sm:$0xff]
    %v105 = vld [vmem:[#allocation6] sm:$0xf]
    %v106 = vld [vmem:[#allocation6 + $0x4] sm:$0xf]
    %v107 = vld [vmem:[#allocation6 + $0x8] sm:$0xf]
    %v108 = vld [vmem:[#allocation6 + $0xc] sm:$0xf]
    %v109 = vld [vmem:[%s4] sm:$0x1]
    %v111 = vlaneseq
    %v112 = vshrl.u32 %v111, 7
    %v113 = vsub.s32 0, %v112
    %v114 = vrot.slane %v109, %v113
    %v120 = vunpack.c.l.b16 %v105
    %v121 = vunpack.c.l.b16 %v106
    %v122 = vunpack.c.l.b16 %v107
    %v123 = vunpack.c.l.b16 %v108
    %v124 = vpack.c.b16 %v121, %v120
    %v125 = vpack.c.b16 %v123, %v122
    %vm128 = vcmask 261120
    %v130 = vsel %vm128, %v104, 0
    %132 = vmatprep.subr.bf16.mxu0 0
    %133 = vmatpush1.bf16.msra.mxu0 %v124
    %134 = vmatprep.subr.bf16.mxu0 0
    %135 = vmatpush1.bf16.msra.mxu0 %v125
    %136 = vmatprep.subr.bf16.mxu0 0
    %137 = vmatpush1.bf16.msra.mxu0 0
    %138 = vmatprep.subr.bf16.mxu0 0
    %139 = vmatpush1.bf16.msra.mxu0 0
    %140 = vmatprep.subr.bf16.mxu0 0
    %141 = vmatpush1.bf16.msra.mxu0 0
    %142 = vmatprep.subr.bf16.mxu0 0
    %143 = vmatpush1.bf16.msra.mxu0 0
    %144 = vmatprep.subr.bf16.mxu0 0
    %145 = vmatpush1.bf16.msra.mxu0 0
    %146 = vmatprep.subr.bf16.mxu0 0
    %147 = vmatpush1.bf16.msra.mxu0 0
    %148 = vmatprep.subr.bf16.mxu0 0
    %149 = vmatpush1.bf16.msra.mxu0 0
    %150 = vmatprep.subr.bf16.mxu0 0
    %151 = vmatpush1.bf16.msra.mxu0 0
    %152 = vmatprep.subr.bf16.mxu0 0
    %153 = vmatpush1.bf16.msra.mxu0 0
    %154 = vmatprep.subr.bf16.mxu0 0
    %155 = vmatpush1.bf16.msra.mxu0 0
    %156 = vmatprep.subr.bf16.mxu0 0
    %157 = vmatpush1.bf16.msra.mxu0 0
    %158 = vmatprep.subr.bf16.mxu0 0
    %159 = vmatpush1.bf16.msra.mxu0 0
    %160 = vmatprep.subr.bf16.mxu0 0
    %161 = vmatpush1.bf16.msra.mxu0 0
    %162 = vmatprep.subr.bf16.mxu0 0
    %163 = vmatpush1.bf16.msra.mxu0 0
    %164 = vmatprep.mubr.bf16.mxu0 0
    %165 = vmatmul.mubr.bf16.gmra.mrb[0].mxu0 %v130
    %v166 = vpop.f32.mrb[0].mxu0
    %v167 = vadd.f32 %v114, %v166
    %v168 = vpop.f32.mrb[0].mxu0
    %v169 = vpop.f32.mrb[0].mxu0
    %v170 = vadd.f32 %v114, %v169
    %v171 = vpop.f32.mrb[0].mxu0
    %172 = vdwg.mxu0
    %v173 = vpack.c.bf16 %v170, %v167
    %v175 = vunpack.c.l.b16 %v173
    %v176 = vunpack.c.h.b16 %v173
    %v177 = vpack.c.b16 %v175, %v175
    %v178 = vpack.c.b16 %v176, %v176
    %vm181 = vcmask 781312
    %182 = vst.msk [vmem:[#allocation8] sm:$0xf] %vm181, %v177
    %183 = vst.msk [vmem:[#allocation8 + $0x4] sm:$0xf] %vm181, %v178
    // Predicated region
    $region34: #{tpu_custom_call.1} parent=1 // pred_check
      _
    $region35: #{tpu_custom_call.1} parent=1 // pred_check_branch
      %185 = sbr.rel (0) target = $region37
    $region36: #{tpu_custom_call.1} parent=1 // pred_region
      %s187 = ssub.s32 128, 128
      %188 = vsyncadd [#allocation5], %s187
      %s189 = sshll.u32 [#allocation8], 4
      %s190 = int_to_ptr.vmem [resolvable:$true] %s189
      %195 = dma.vmem_to_hbm [thread:$0]  %s190, 128, %s5, [#allocation5], 64, 64, 4
    $region37: #{tpu_custom_call.1} parent=1 // pred_fallthru
      _
    // Predicated region
    $region38: #{tpu_custom_call.1} parent=1 // pred_check
      _
    $region39: #{tpu_custom_call.1} parent=1 // pred_check_branch
      %197 = sbr.rel (0) target = $region41
    $region40: #{tpu_custom_call.1} parent=1 // pred_region
      %198 = dma.done [#allocation5], 128
    $region41: #{tpu_custom_call.1} parent=1 // pred_fallthru
      _
    %199 = vsyncpa [#allocation4], 1
    %200 = vsyncpa [#allocation7], 1
    %201 = vsyncpa [#allocation5], 1

</llo_original>
